<compile_context>
chip_gen: v7x
topology: tpu7x:2x2x1
jax: 0.10.0
libtpu: 0.0.40
codegen_flags: <defaults>
</compile_context>

<pallas_src>
import functools

import jax
import jax.numpy as jnp
import numpy as np
from jax.experimental import pallas as pl
from jax.experimental.pallas import tpu as pltpu


def _round_up(n, m):
    return ((n + m - 1) // m) * m


def _device_profile():
    """Per-generation tiling / VMEM budget defaults (trace-time, Python only)."""
    kind = ""
    try:
        kind = jax.devices()[0].device_kind.lower()
    except Exception:
        pass
    if "v7" in kind or "7x" in kind:
        # 64 MiB VMEM per TensorCore; weights replicated on both cores.
        return dict(name="v7x", vmem_cap=48 << 20, lane_target=256,
                    block_m=256, multi_tile=True)
    if "v6" in kind or "trillium" in kind:
        return dict(name="v6e", vmem_cap=100 << 20, lane_target=256,
                    block_m=1024, multi_tile=False)
    if "v5 lite" in kind or "v5lite" in kind or "v5e" in kind:
        return dict(name="v5e", vmem_cap=100 << 20, lane_target=128,
                    block_m=512, multi_tile=False)
    # Unknown generation: conservative budget, safe 128-lane padding.
    return dict(name="unknown", vmem_cap=48 << 20, lane_target=128,
                block_m=512, multi_tile=True)


def _pad_width(dout, lane_target):
    """Pad a layer width to a multiple of 128 lanes; bump small widths up to
    lane_target (256 on v6e/v7x so the 2x256x256 MXU is filled)."""
    return max(_round_up(dout, 128), lane_target)


def _make_mlp_kernel(num_layers, slope, out_dim, matmul_dtype):
    """Kernel refs = (x, s, w0x, w0s, b0, w1, b1, ..., wL, bL, out)."""

    def kernel(x_ref, s_ref, *refs):
        out_ref = refs[-1]
        params = refs[:-1]

        w0x = params[0][...]  # (res_size, P1)  matmul_dtype
        w0s = params[1][...]  # (att_size, P1)  matmul_dtype
        b0 = params[2][...]   # (1, P1)         f32

        xv = x_ref[...].astype(matmul_dtype)
        sv = s_ref[...].astype(matmul_dtype)

        # Fused concat: two MXU matmuls into one f32 accumulator.  Issue the
        # large-K dot first so the MXU result FIFO hides the small one's drain.
        if x_ref.shape[1] >= s_ref.shape[1]:
            h = jnp.dot(xv, w0x, preferred_element_type=jnp.float32)
            h = h + jnp.dot(sv, w0s, preferred_element_type=jnp.float32)
        else:
            h = jnp.dot(sv, w0s, preferred_element_type=jnp.float32)
            h = h + jnp.dot(xv, w0x, preferred_element_type=jnp.float32)
        h = h + b0
        if num_layers > 1:
            h = jnp.where(h > 0.0, h, slope * h)  # LeakyReLU(0.2), f32

        for i in range(1, num_layers):
            w = params[3 + 2 * (i - 1)][...]      # (P_i, P_{i+1}) matmul_dtype
            b = params[3 + 2 * (i - 1) + 1][...]  # (1, P_{i+1})   f32
            h = jnp.dot(h.astype(matmul_dtype), w,
                        preferred_element_type=jnp.float32) + b
            if i + 1 < num_layers:
                h = jnp.where(h > 0.0, h, slope * h)

        # Narrow store: only the true logit columns reach HBM (padded columns
        # were only needed to keep the matmuls lane-dense).
        out_ref[...] = h[:, :out_dim]

    return kernel


def _pack_params(weights, biases, res_size, lane_target, matmul_dtype):
    """Split W0 into (x-part, s-part), zero-pad every layer's output width
    (and the matching next-layer input rows) to lane-dense sizes, and cast
    matmul operands to matmul_dtype (biases stay f32).  Zero padding is
    mathematically inert.  Returns (flat param list, padded final width)."""
    packed = []
    prev_out_pad = None
    for i, (w, b) in enumerate(zip(weights, biases)):
        din, dout = w.shape
        dout_pad = _pad_width(dout, lane_target)
        pad_cols = dout_pad - dout
        if i == 0:
            w0x = jnp.pad(w[:res_size], ((0, 0), (0, pad_cols))).astype(matmul_dtype)
            w0s = jnp.pad(w[res_size:], ((0, 0), (0, pad_cols))).astype(matmul_dtype)
            b0 = jnp.pad(b, (0, pad_cols)).reshape(1, -1).astype(jnp.float32)
            packed += [w0x, w0s, b0]
        else:
            pad_rows = prev_out_pad - din
            w_p = jnp.pad(w, ((0, pad_rows), (0, pad_cols))).astype(matmul_dtype)
            b_p = jnp.pad(b, (0, pad_cols)).reshape(1, -1).astype(jnp.float32)
            packed += [w_p, b_p]
        prev_out_pad = dout_pad
    return packed, prev_out_pad


def _vmem_footprint(tm, packed, res_size, att_size, out_dim):
    """Conservative VMEM estimate: resident weights (x2 safety), double-buffered
    x/s/out tiles, live activations of the widest layer."""
    w_bytes = sum(int(np.prod(p.shape)) * p.dtype.itemsize for p in packed)
    max_w = max(int(p.shape[-1]) for p in packed)
    io_bytes = 2 * tm * (res_size + att_size + out_dim) * 4
    act_bytes = 3 * tm * max_w * 4
    return 2 * w_bytes + io_bytes + act_bytes


def _choose_tile(B, block_m, want_multi_tile, fits):
    """Pick (tm, b_pad): tm multiple of 8, b_pad multiple of tm.  Prefer exact
    divisors of round_up(B, 8) (no wrapper pad beyond 8-row rounding); fall
    back to minimal padding only when the divisor tile would be tiny."""
    b8 = _round_up(B, 8)
    limit = max(8, (min(block_m, b8) // 8) * 8)
    tm_cap = limit
    while tm_cap > 8 and not fits(tm_cap):
        tm_cap -= 8

    def ok(m):
        # On v7x, keep >=2 batch tiles so both TensorCores get work.
        return (not want_multi_tile) or b8 <= 8 or b8 // m >= 2

    divs = [m for m in range(8, tm_cap + 1, 8) if b8 % m == 0 and ok(m)]
    tm_div = max(divs) if divs else 8
    if tm_div * 4 >= tm_cap:
        return tm_div, b8

    # Awkward batch factorization: pad the batch (<= tm-1 rows) instead of
    # degrading to a tiny tile.
    tm = tm_cap
    if want_multi_tile and b8 > 8:
        tm = max(8, min(tm, _round_up((b8 + 1) // 2, 8)))
    return tm, _round_up(b8, tm)


def discriminator_forward(x, s, weights, biases, *, slope=0.2,
                          matmul_dtype=jnp.bfloat16, block_m=None):
    """x: (B, res_size), s: (B, att_size); weights[i]: (in_i, out_i) f32,
    biases[i]: (out_i,) f32.  Returns (B, out_dim) f32 matching the PyTorch
    Discriminator.forward (out_dim == 1)."""
    B, res_size = x.shape
    att_size = s.shape[1]
    num_layers = len(weights)
    out_dim = weights[-1].shape[1]

    prof = _device_profile()
    if block_m is None:
        block_m = prof["block_m"]

    # NOTE: in a real model, pack once outside the step function and reuse.
    packed, _ = _pack_params(weights, biases, res_size,
                             prof["lane_target"], matmul_dtype)

    cap = prof["vmem_cap"]

    def fits(tm_):
        return _vmem_footprint(tm_, packed, res_size, att_size, out_dim) <= cap - (4 << 20)

    tm, b_pad = _choose_tile(B, block_m, prof["multi_tile"], fits)
    if b_pad != B:
        x = jnp.pad(x, ((0, b_pad - B), (0, 0)))
        s = jnp.pad(s, ((0, b_pad - B), (0, 0)))

    vmem_limit = int(min(cap, max(_vmem_footprint(tm, packed, res_size, att_size,
                                                  out_dim) + (4 << 20), 32 << 20)))

    # TODO(synk): for production widths where packed weights exceed ~40-50 MiB
    # (v7x's 64 MiB VMEM / TC), add a K-reduction grid axis (last, "arbitrary")
    # with an f32 VMEM accumulator + pl.when init/finalize so W0/W1 stream
    # instead of staying fully VMEM-resident.

    grid = (b_pad // tm,)

    in_specs = [
        pl.BlockSpec((tm, res_size), lambda i: (i, 0)),
        pl.BlockSpec((tm, att_size), lambda i: (i, 0)),
    ] + [
        # Full-array, grid-invariant blocks: weights/biases stay VMEM-resident.
        pl.BlockSpec(p.shape, lambda i: (0, 0))
        for p in packed
    ]

    weight_params = [packed[0], packed[1]] + list(packed[3::2])
    flops = sum(2 * b_pad * int(w.shape[0]) * int(w.shape[1]) for w in weight_params)
    bytes_accessed = (b_pad * (res_size + att_size) * 4
                      + sum(int(np.prod(p.shape)) * p.dtype.itemsize for p in packed)
                      + b_pad * out_dim * 4)

    out = pl.pallas_call(
        _make_mlp_kernel(num_layers, slope, out_dim, matmul_dtype),
        grid=grid,
        in_specs=in_specs,
        out_specs=pl.BlockSpec((tm, out_dim), lambda i: (i, 0)),
        out_shape=jax.ShapeDtypeStruct((b_pad, out_dim), jnp.float32),
        compiler_params=pltpu.CompilerParams(
            dimension_semantics=("parallel",),
            vmem_limit_bytes=vmem_limit,
        ),
        cost_estimate=pl.CostEstimate(
            flops=int(flops),
            transcendentals=0,
            bytes_accessed=int(bytes_accessed),
        ),
    )(x, s, *packed)

    return out[:B] if b_pad != B else out


def init_discriminator_params(key, res_size, att_size, layer_sizes):
    """Mirror the PyTorch __init__:
      sizes = [res_size + att_size] + layer_sizes, final out = 1
      Linear weights ~ N(0, 0.02), biases = 0 (weights_init).
    Weights stored as (in, out) so the kernel does h @ W."""
    layer_sizes = list(layer_sizes) + [1]
    dims_in = [res_size + att_size] + layer_sizes[:-1]
    dims_out = layer_sizes
    weights, biases = [], []
    for din, dout in zip(dims_in, dims_out):
        key, sub = jax.random.split(key)
        w = 0.02 * jax.random.normal(sub, (din, dout), dtype=jnp.float32)
        b = jnp.zeros((dout,), dtype=jnp.float32)
        weights.append(w)
        biases.append(b)
    return weights, biases


def _reference_forward(x, s, weights, biases, slope=0.2):
    h = jnp.concatenate([x, s], axis=-1)
    n = len(weights)
    for i, (w, b) in enumerate(zip(weights, biases)):
        h = h @ w + b
        if i + 1 < n:
            h = jnp.where(h > 0.0, h, slope * h)
    return h


if __name__ == "__main__":
    key = jax.random.PRNGKey(0)

    B = 8
    res_size = 16
    att_size = 16
    layer_sizes = [32, 16]  # hidden layers; final Linear to 1 added internally

    kx, ks, kp = jax.random.split(key, 3)
    x = jax.random.normal(kx, (B, res_size), dtype=jnp.float32)
    s = jax.random.normal(ks, (B, att_size), dtype=jnp.float32)

    weights, biases = init_discriminator_params(kp, res_size, att_size, layer_sizes)

    ref = np.asarray(_reference_forward(x, s, weights, biases))

    # Exact f32 path (tight tolerance vs. the reference).
    fwd_f32 = jax.jit(functools.partial(discriminator_forward, slope=0.2,
                                        matmul_dtype=jnp.float32))
    out_f32 = jax.block_until_ready(fwd_f32(x, s, weights, biases))
    assert out_f32.shape == (B, 1), out_f32.shape
    assert np.allclose(np.asarray(out_f32), ref, atol=1e-5, rtol=1e-4)

    # Default bf16-matmul / f32-accumulate path (the fast one on the MXU).
    fwd_bf16 = jax.jit(functools.partial(discriminator_forward, slope=0.2,
                                         matmul_dtype=jnp.bfloat16))
    out_bf16 = jax.block_until_ready(fwd_bf16(x, s, weights, biases))
    assert out_bf16.shape == (B, 1), out_bf16.shape
    assert np.allclose(np.asarray(out_bf16), ref, atol=5e-3, rtol=5e-2)

    # NOTE: at toy B=8 the call is launch-latency bound; the resident bf16
    # weights, generation-aware tiling and narrow logit store pay off at real
    # batch / hidden sizes.
    print("KERNEL_OK")
</pallas_src>

<mosaic_0001>
module attributes {stable_mosaic.version = 11 : i64} {
  func.func @kernel(%arg0: i32, %arg1: memref<8x16xf32, #tpu.memory_space<vmem>>, %arg2: memref<8x16xf32, #tpu.memory_space<vmem>>, %arg3: memref<16x128xf32, #tpu.memory_space<vmem>>, %arg4: memref<16x128xf32, #tpu.memory_space<vmem>>, %arg5: memref<1x128xf32, #tpu.memory_space<vmem>>, %arg6: memref<128x128xf32, #tpu.memory_space<vmem>>, %arg7: memref<1x128xf32, #tpu.memory_space<vmem>>, %arg8: memref<128x128xf32, #tpu.memory_space<vmem>>, %arg9: memref<1x128xf32, #tpu.memory_space<vmem>>, %arg10: memref<8x1xf32, #tpu.memory_space<vmem>>) attributes {dimension_semantics = [#tpu.dimension_semantics<parallel>], iteration_bounds = array<i64: 1>, scalar_prefetch = 0 : i64, scratch_operands = 0 : i64, tpu.core_type = #tpu.core_type<tc>, window_params = [{transform_indices = @transform_0, window_bounds = array<i64: 8, 16>}, {transform_indices = @transform_1, window_bounds = array<i64: 8, 16>}, {pipeline_mode = #tpu.pipeline_mode<synchronous>, transform_indices = @transform_2, window_bounds = array<i64: 16, 128>}, {pipeline_mode = #tpu.pipeline_mode<synchronous>, transform_indices = @transform_3, window_bounds = array<i64: 16, 128>}, {pipeline_mode = #tpu.pipeline_mode<synchronous>, transform_indices = @transform_4, window_bounds = array<i64: 1, 128>}, {pipeline_mode = #tpu.pipeline_mode<synchronous>, transform_indices = @transform_5, window_bounds = array<i64: 128, 128>}, {pipeline_mode = #tpu.pipeline_mode<synchronous>, transform_indices = @transform_6, window_bounds = array<i64: 1, 128>}, {pipeline_mode = #tpu.pipeline_mode<synchronous>, transform_indices = @transform_7, window_bounds = array<i64: 128, 128>}, {pipeline_mode = #tpu.pipeline_mode<synchronous>, transform_indices = @transform_8, window_bounds = array<i64: 1, 128>}, {transform_indices = @transform_9, window_bounds = array<i64: 8, 1>}]} {
    %c0 = arith.constant 0 : index
    %c0_0 = arith.constant 0 : index
    %0 = vector.load %arg3[%c0, %c0_0] : memref<16x128xf32, #tpu.memory_space<vmem>>, vector<16x128xf32>
    %c0_1 = arith.constant 0 : index
    %c0_2 = arith.constant 0 : index
    %1 = vector.load %arg4[%c0_1, %c0_2] : memref<16x128xf32, #tpu.memory_space<vmem>>, vector<16x128xf32>
    %c0_3 = arith.constant 0 : index
    %c0_4 = arith.constant 0 : index
    %2 = vector.load %arg5[%c0_3, %c0_4] : memref<1x128xf32, #tpu.memory_space<vmem>>, vector<1x128xf32>
    %c0_5 = arith.constant 0 : index
    %c0_6 = arith.constant 0 : index
    %3 = vector.load %arg1[%c0_5, %c0_6] : memref<8x16xf32, #tpu.memory_space<vmem>>, vector<8x16xf32>
    %c0_7 = arith.constant 0 : index
    %c0_8 = arith.constant 0 : index
    %4 = vector.load %arg2[%c0_7, %c0_8] : memref<8x16xf32, #tpu.memory_space<vmem>>, vector<8x16xf32>
    %cst = arith.constant dense<0.000000e+00> : vector<8x128xf32>
    %5 = tpu.matmul %3, %0, %cst {dimension_numbers = #tpu.dot_dimension_numbers<[1], [0], [0], [1], [0, 0, 1, 1], [], []>} : vector<8x16xf32>, vector<16x128xf32>, vector<8x128xf32> -> vector<8x128xf32>
    %cst_9 = arith.constant dense<0.000000e+00> : vector<8x128xf32>
    %6 = tpu.matmul %4, %1, %cst_9 {dimension_numbers = #tpu.dot_dimension_numbers<[1], [0], [0], [1], [0, 0, 1, 1], [], []>} : vector<8x16xf32>, vector<16x128xf32>, vector<8x128xf32> -> vector<8x128xf32>
    %7 = arith.addf %5, %6 : vector<8x128xf32>
    %8 = vector.broadcast %2 : vector<1x128xf32> to vector<8x128xf32>
    %9 = arith.addf %7, %8 : vector<8x128xf32>
    %cst_10 = arith.constant 0.000000e+00 : f32
    %10 = vector.broadcast %cst_10 : f32 to vector<8x128xf32>
    %11 = arith.cmpf ogt, %9, %10 : vector<8x128xf32>
    %cst_11 = arith.constant 2.000000e-01 : f32
    %12 = vector.broadcast %cst_11 : f32 to vector<8x128xf32>
    %13 = arith.mulf %12, %9 : vector<8x128xf32>
    %14 = arith.select %11, %9, %13 : vector<8x128xi1>, vector<8x128xf32>
    %c0_12 = arith.constant 0 : index
    %c0_13 = arith.constant 0 : index
    %15 = vector.load %arg6[%c0_12, %c0_13] : memref<128x128xf32, #tpu.memory_space<vmem>>, vector<128x128xf32>
    %c0_14 = arith.constant 0 : index
    %c0_15 = arith.constant 0 : index
    %16 = vector.load %arg7[%c0_14, %c0_15] : memref<1x128xf32, #tpu.memory_space<vmem>>, vector<1x128xf32>
    %cst_16 = arith.constant dense<0.000000e+00> : vector<8x128xf32>
    %17 = tpu.matmul %14, %15, %cst_16 {dimension_numbers = #tpu.dot_dimension_numbers<[1], [0], [0], [1], [0, 0, 1, 1], [], []>} : vector<8x128xf32>, vector<128x128xf32>, vector<8x128xf32> -> vector<8x128xf32>
    %18 = vector.broadcast %16 : vector<1x128xf32> to vector<8x128xf32>
    %19 = arith.addf %17, %18 : vector<8x128xf32>
    %cst_17 = arith.constant 0.000000e+00 : f32
    %20 = vector.broadcast %cst_17 : f32 to vector<8x128xf32>
    %21 = arith.cmpf ogt, %19, %20 : vector<8x128xf32>
    %cst_18 = arith.constant 2.000000e-01 : f32
    %22 = vector.broadcast %cst_18 : f32 to vector<8x128xf32>
    %23 = arith.mulf %22, %19 : vector<8x128xf32>
    %24 = arith.select %21, %19, %23 : vector<8x128xi1>, vector<8x128xf32>
    %c0_19 = arith.constant 0 : index
    %c0_20 = arith.constant 0 : index
    %25 = vector.load %arg8[%c0_19, %c0_20] : memref<128x128xf32, #tpu.memory_space<vmem>>, vector<128x128xf32>
    %c0_21 = arith.constant 0 : index
    %c0_22 = arith.constant 0 : index
    %26 = vector.load %arg9[%c0_21, %c0_22] : memref<1x128xf32, #tpu.memory_space<vmem>>, vector<1x128xf32>
    %cst_23 = arith.constant dense<0.000000e+00> : vector<8x128xf32>
    %27 = tpu.matmul %24, %25, %cst_23 {dimension_numbers = #tpu.dot_dimension_numbers<[1], [0], [0], [1], [0, 0, 1, 1], [], []>} : vector<8x128xf32>, vector<128x128xf32>, vector<8x128xf32> -> vector<8x128xf32>
    %28 = vector.broadcast %26 : vector<1x128xf32> to vector<8x128xf32>
    %29 = arith.addf %27, %28 : vector<8x128xf32>
    %30 = vector.extract_strided_slice %29 {offsets = [0, 0], sizes = [8, 1], strides = [1, 1]} : vector<8x128xf32> to vector<8x1xf32>
    %c0_24 = arith.constant 0 : index
    %c0_25 = arith.constant 0 : index
    %31 = vector.load %arg10[%c0_24, %c0_25] : memref<8x1xf32, #tpu.memory_space<vmem>>, vector<8x1xf32>
    tpu.vector_store %arg10[%c0_24, %c0_25], %30 {strides = array<i32>} : memref<8x1xf32, #tpu.memory_space<vmem>>, vector<8x1xf32>,
    return
  }
  func.func @transform_0(%arg0: i32) -> (i32, i32) {
    %c0_i32 = arith.constant 0 : i32
    %c0_i32_0 = arith.constant 0 : i32
    return %arg0, %c0_i32 : i32, i32
  }
  func.func @transform_1(%arg0: i32) -> (i32, i32) {
    %c0_i32 = arith.constant 0 : i32
    %c0_i32_0 = arith.constant 0 : i32
    return %arg0, %c0_i32 : i32, i32
  }
  func.func @transform_2(%arg0: i32) -> (i32, i32) {
    %c0_i32 = arith.constant 0 : i32
    %c0_i32_0 = arith.constant 0 : i32
    %c0_i32_1 = arith.constant 0 : i32
    return %c0_i32, %c0_i32_0 : i32, i32
  }
  func.func @transform_3(%arg0: i32) -> (i32, i32) {
    %c0_i32 = arith.constant 0 : i32
    %c0_i32_0 = arith.constant 0 : i32
    %c0_i32_1 = arith.constant 0 : i32
    return %c0_i32, %c0_i32_0 : i32, i32
  }
  func.func @transform_4(%arg0: i32) -> (i32, i32) {
    %c0_i32 = arith.constant 0 : i32
    %c0_i32_0 = arith.constant 0 : i32
    %c0_i32_1 = arith.constant 0 : i32
    return %c0_i32, %c0_i32_0 : i32, i32
  }
  func.func @transform_5(%arg0: i32) -> (i32, i32) {
    %c0_i32 = arith.constant 0 : i32
    %c0_i32_0 = arith.constant 0 : i32
    %c0_i32_1 = arith.constant 0 : i32
    return %c0_i32, %c0_i32_0 : i32, i32
  }
  func.func @transform_6(%arg0: i32) -> (i32, i32) {
    %c0_i32 = arith.constant 0 : i32
    %c0_i32_0 = arith.constant 0 : i32
    %c0_i32_1 = arith.constant 0 : i32
    return %c0_i32, %c0_i32_0 : i32, i32
  }
  func.func @transform_7(%arg0: i32) -> (i32, i32) {
    %c0_i32 = arith.constant 0 : i32
    %c0_i32_0 = arith.constant 0 : i32
    %c0_i32_1 = arith.constant 0 : i32
    return %c0_i32, %c0_i32_0 : i32, i32
  }
  func.func @transform_8(%arg0: i32) -> (i32, i32) {
    %c0_i32 = arith.constant 0 : i32
    %c0_i32_0 = arith.constant 0 : i32
    %c0_i32_1 = arith.constant 0 : i32
    return %c0_i32, %c0_i32_0 : i32, i32
  }
  func.func @transform_9(%arg0: i32) -> (i32, i32) {
    %c0_i32 = arith.constant 0 : i32
    %c0_i32_0 = arith.constant 0 : i32
    return %arg0, %c0_i32 : i32, i32
  }
}

</mosaic_0001>

<llo_original>
// kernel: discriminator_forward.1
$region0: #{discriminator_forward.1}
  #allocation0 [shape = 'u32[]', space=smem, size = 0x4, offset = 0x4, fixed_abs, tag = 'smem constant byte address 0x4 - core index']
  #allocation1 [shape = 'u32[144,128]{1,0:T(1,128)}', space=vmem, size = 0x12000, scoped, tag = 'internal scratch']
  %s0 = inlined_call_operand.vmem [shape: f32[8,16], index: 0, kind: input, shape index: {}]
  %s1 = inlined_call_operand.vmem [shape: f32[8,16], index: 1, kind: input, shape index: {}]
  %s2 = inlined_call_operand.vmem [shape: f32[16,128], index: 2, kind: input, shape index: {}]
  %s3 = inlined_call_operand.vmem [shape: f32[16,128], index: 3, kind: input, shape index: {}]
  %s4 = inlined_call_operand.vmem [shape: f32[1,128], index: 4, kind: input, shape index: {}]
  %s5 = inlined_call_operand.vmem [shape: f32[128,128], index: 5, kind: input, shape index: {}]
  %s6 = inlined_call_operand.vmem [shape: f32[1,128], index: 6, kind: input, shape index: {}]
  %s7 = inlined_call_operand.vmem [shape: f32[128,128], index: 7, kind: input, shape index: {}]
  %s8 = inlined_call_operand.vmem [shape: f32[1,128], index: 8, kind: input, shape index: {}]
  %s9 = inlined_call_operand.vmem [shape: f32[8,1], index: 9, kind: output, shape index: {}]
  %s10 = sld [smem:[#allocation0]]
  $region46: #{discriminator_forward.1} parent=0
    _
  %s12 = ssub.s32 1, %s10
  %s13 = scalar_select 0, %s12, %s10
  // Predicated region
  $region2: #{discriminator_forward.1} parent=0 // pred_check
    _
  $region3: #{discriminator_forward.1} parent=0 // pred_check_branch
    %15 = sbr.rel (0) target = $region5
  $region4: #{discriminator_forward.1} parent=0 // pred_region
    _
  $region5: #{discriminator_forward.1} parent=0 // pred_fallthru
    _
  // Predicated region
  $region6: #{discriminator_forward.1} parent=0 // pred_check
    _
  $region7: #{discriminator_forward.1} parent=0 // pred_check_branch
    %17 = sbr.rel (0) target = $region9
  $region8: #{discriminator_forward.1} parent=0 // pred_region
    _
  $region9: #{discriminator_forward.1} parent=0 // pred_fallthru
    _
  // Predicated region
  $region10: #{discriminator_forward.1} parent=0 // pred_check
    _
  $region11: #{discriminator_forward.1} parent=0 // pred_check_branch
    %19 = sbr.rel (0) target = $region13
  $region12: #{discriminator_forward.1} parent=0 // pred_region
    _
  $region13: #{discriminator_forward.1} parent=0 // pred_fallthru
    _
  // Predicated region
  $region14: #{discriminator_forward.1} parent=0 // pred_check
    _
  $region15: #{discriminator_forward.1} parent=0 // pred_check_branch
    %21 = sbr.rel (0) target = $region17
  $region16: #{discriminator_forward.1} parent=0 // pred_region
    _
  $region17: #{discriminator_forward.1} parent=0 // pred_fallthru
    _
  // Predicated region
  $region18: #{discriminator_forward.1} parent=0 // pred_check
    _
  $region19: #{discriminator_forward.1} parent=0 // pred_check_branch
    %23 = sbr.rel (0) target = $region21
  $region20: #{discriminator_forward.1} parent=0 // pred_region
    _
  $region21: #{discriminator_forward.1} parent=0 // pred_fallthru
    _
  // Predicated region
  $region22: #{discriminator_forward.1} parent=0 // pred_check
    _
  $region23: #{discriminator_forward.1} parent=0 // pred_check_branch
    %25 = sbr.rel (0) target = $region25
  $region24: #{discriminator_forward.1} parent=0 // pred_region
    _
  $region25: #{discriminator_forward.1} parent=0 // pred_fallthru
    _
  // Predicated region
  $region26: #{discriminator_forward.1} parent=0 // pred_check
    _
  $region27: #{discriminator_forward.1} parent=0 // pred_check_branch
    %27 = sbr.rel (0) target = $region29
  $region28: #{discriminator_forward.1} parent=0 // pred_region
    _
  $region29: #{discriminator_forward.1} parent=0 // pred_fallthru
    _
  // Predicated region
  $region30: #{discriminator_forward.1} parent=0 // pred_check
    _
  $region31: #{discriminator_forward.1} parent=0 // pred_check_branch
    %29 = sbr.rel (0) target = $region33
  $region32: #{discriminator_forward.1} parent=0 // pred_region
    _
  $region33: #{discriminator_forward.1} parent=0 // pred_fallthru
    _
  // Predicated region
  $region34: #{discriminator_forward.1} parent=0 // pred_check
    _
  $region35: #{discriminator_forward.1} parent=0 // pred_check_branch
    %31 = sbr.rel (0) target = $region37
  $region36: #{discriminator_forward.1} parent=0 // pred_region
    _
  $region37: #{discriminator_forward.1} parent=0 // pred_fallthru
    _
  %v32 = vld [vmem:[%s2] sm:$0xff]
  %v33 = vld [vmem:[%s2 + $0x8] sm:$0xff]
  %v34 = vld [vmem:[%s3] sm:$0xff]
  %v35 = vld [vmem:[%s3 + $0x8] sm:$0xff]
  %v36 = vld [vmem:[%s4] sm:$0x1]
  %v37 = vld [vmem:[%s0] sm:$0xff]
  %v38 = vld [vmem:[%s1] sm:$0xff]
  %vm39 = vcmask 130048
  %v41 = vsel %vm39, %v38, 0
  %43 = vmatprep.subr.mxu0 0.0
  %44 = vmatpush1.msra.mxu0 %v34
  %45 = vmatprep.subr.mxu0 0.0
  %46 = vmatpush1.msra.mxu0 %v35
  %47 = vmatprep.subr.mxu0 0.0
  %48 = vmatpush1.msra.mxu0 0.0
  %49 = vmatprep.subr.mxu0 0.0
  %50 = vmatpush1.msra.mxu0 0.0
  %51 = vmatprep.subr.mxu0 0.0
  %52 = vmatpush1.msra.mxu0 0.0
  %53 = vmatprep.subr.mxu0 0.0
  %54 = vmatpush1.msra.mxu0 0.0
  %55 = vmatprep.subr.mxu0 0.0
  %56 = vmatpush1.msra.mxu0 0.0
  %57 = vmatprep.subr.mxu0 0.0
  %58 = vmatpush1.msra.mxu0 0.0
  %59 = vmatprep.subr.mxu0 0.0
  %60 = vmatpush1.msra.mxu0 0.0
  %61 = vmatprep.subr.mxu0 0.0
  %62 = vmatpush1.msra.mxu0 0.0
  %63 = vmatprep.subr.mxu0 0.0
  %64 = vmatpush1.msra.mxu0 0.0
  %65 = vmatprep.subr.mxu0 0.0
  %66 = vmatpush1.msra.mxu0 0.0
  %67 = vmatprep.subr.mxu0 0.0
  %68 = vmatpush1.msra.mxu0 0.0
  %69 = vmatprep.subr.mxu0 0.0
  %70 = vmatpush1.msra.mxu0 0.0
  %71 = vmatprep.subr.mxu0 0.0
  %72 = vmatpush1.msra.mxu0 0.0
  %73 = vmatprep.subr.mxu0 0.0
  %74 = vmatpush1.msra.mxu0 0.0
  %75 = vmatprep.subr.mxu0 0.0
  %76 = vmatpush1.msra.mxu0 0.0
  %77 = vmatprep.subr.mxu0 0.0
  %78 = vmatpush1.msra.mxu0 0.0
  %79 = vmatprep.subr.mxu0 0.0
  %80 = vmatpush1.msra.mxu0 0.0
  %81 = vmatprep.subr.mxu0 0.0
  %82 = vmatpush1.msra.mxu0 0.0
  %83 = vmatprep.subr.mxu0 0.0
  %84 = vmatpush1.msra.mxu0 0.0
  %85 = vmatprep.subr.mxu0 0.0
  %86 = vmatpush1.msra.mxu0 0.0
  %87 = vmatprep.subr.mxu0 0.0
  %88 = vmatpush1.msra.mxu0 0.0
  %89 = vmatprep.subr.mxu0 0.0
  %90 = vmatpush1.msra.mxu0 0.0
  %91 = vmatprep.subr.mxu0 0.0
  %92 = vmatpush1.msra.mxu0 0.0
  %93 = vmatprep.subr.mxu0 0.0
  %94 = vmatpush1.msra.mxu0 0.0
  %95 = vmatprep.subr.mxu0 0.0
  %96 = vmatpush1.msra.mxu0 0.0
  %97 = vmatprep.subr.mxu0 0.0
  %98 = vmatpush1.msra.mxu0 0.0
  %99 = vmatprep.subr.mxu0 0.0
  %100 = vmatpush1.msra.mxu0 0.0
  %101 = vmatprep.subr.mxu0 0.0
  %102 = vmatpush1.msra.mxu0 0.0
  %103 = vmatprep.subr.mxu0 0.0
  %104 = vmatpush1.msra.mxu0 0.0
  %105 = vmatprep.subr.mxu0 0.0
  %106 = vmatpush1.msra.mxu0 0.0
  %107 = vmatprep.mubr.f32.mxu0 0.0
  %108 = vmatmul.mubr.f32.gmra.mrb[0].mxu0 %v41
  %v109 = vpop.f32.mrb[0].mxu0
  %v110 = vadd.f32 0.0, %v109
  %v111 = vpop.f32.mrb[0].mxu0
  %112 = vdwg.mxu0
  %v114 = vsel %vm39, %v37, 0
  %116 = vmatprep.subr.mxu0 0.0
  %117 = vmatpush1.msra.mxu0 %v32
  %118 = vmatprep.subr.mxu0 0.0
  %119 = vmatpush1.msra.mxu0 %v33
  %120 = vmatprep.subr.mxu0 0.0
  %121 = vmatpush1.msra.mxu0 0.0
  %122 = vmatprep.subr.mxu0 0.0
  %123 = vmatpush1.msra.mxu0 0.0
  %124 = vmatprep.subr.mxu0 0.0
  %125 = vmatpush1.msra.mxu0 0.0
  %126 = vmatprep.subr.mxu0 0.0
  %127 = vmatpush1.msra.mxu0 0.0
  %128 = vmatprep.subr.mxu0 0.0
  %129 = vmatpush1.msra.mxu0 0.0
  %130 = vmatprep.subr.mxu0 0.0
  %131 = vmatpush1.msra.mxu0 0.0
  %132 = vmatprep.subr.mxu0 0.0
  %133 = vmatpush1.msra.mxu0 0.0
  %134 = vmatprep.subr.mxu0 0.0
  %135 = vmatpush1.msra.mxu0 0.0
  %136 = vmatprep.subr.mxu0 0.0
  %137 = vmatpush1.msra.mxu0 0.0
  %138 = vmatprep.subr.mxu0 0.0
  %139 = vmatpush1.msra.mxu0 0.0
  %140 = vmatprep.subr.mxu0 0.0
  %141 = vmatpush1.msra.mxu0 0.0
  %142 = vmatprep.subr.mxu0 0.0
  %143 = vmatpush1.msra.mxu0 0.0
  %144 = vmatprep.subr.mxu0 0.0
  %145 = vmatpush1.msra.mxu0 0.0
  %146 = vmatprep.subr.mxu0 0.0
  %147 = vmatpush1.msra.mxu0 0.0
  %148 = vmatprep.subr.mxu0 0.0
  %149 = vmatpush1.msra.mxu0 0.0
  %150 = vmatprep.subr.mxu0 0.0
  %151 = vmatpush1.msra.mxu0 0.0
  %152 = vmatprep.subr.mxu0 0.0
  %153 = vmatpush1.msra.mxu0 0.0
  %154 = vmatprep.subr.mxu0 0.0
  %155 = vmatpush1.msra.mxu0 0.0
  %156 = vmatprep.subr.mxu0 0.0
  %157 = vmatpush1.msra.mxu0 0.0
  %158 = vmatprep.subr.mxu0 0.0
  %159 = vmatpush1.msra.mxu0 0.0
  %160 = vmatprep.subr.mxu0 0.0
  %161 = vmatpush1.msra.mxu0 0.0
  %162 = vmatprep.subr.mxu0 0.0
  %163 = vmatpush1.msra.mxu0 0.0
  %164 = vmatprep.subr.mxu0 0.0
  %165 = vmatpush1.msra.mxu0 0.0
  %166 = vmatprep.subr.mxu0 0.0
  %167 = vmatpush1.msra.mxu0 0.0
  %168 = vmatprep.subr.mxu0 0.0
  %169 = vmatpush1.msra.mxu0 0.0
  %170 = vmatprep.subr.mxu0 0.0
  %171 = vmatpush1.msra.mxu0 0.0
  %172 = vmatprep.subr.mxu0 0.0
  %173 = vmatpush1.msra.mxu0 0.0
  %174 = vmatprep.subr.mxu0 0.0
  %175 = vmatpush1.msra.mxu0 0.0
  %176 = vmatprep.subr.mxu0 0.0
  %177 = vmatpush1.msra.mxu0 0.0
  %178 = vmatprep.subr.mxu0 0.0
  %179 = vmatpush1.msra.mxu0 0.0
  %180 = vmatprep.mubr.f32.mxu0 0.0
  %181 = vmatmul.mubr.f32.gmra.mrb[0].mxu0 %v114
  %v182 = vpop.f32.mrb[0].mxu0
  %v183 = vadd.f32 %v110, %v182
  %v184 = vpop.f32.mrb[0].mxu0
  %185 = vdwg.mxu0
  %v187 = vlaneseq
  %v188 = vshrl.u32 %v187, 7
  %v189 = vsub.s32 0, %v188
  %v190 = vrot.slane %v36, %v189
  %v192 = vadd.f32 %v183, %v190
  %vm193 = vcmp.gt.f32.partialorder %v192, 0.0
  %v194 = vmul.f32 %v192, 0.2
  %v195 = vsel %vm193, %v192, %v194
  %v196 = vld [vmem:[%s5] sm:$0xff]
  %v197 = vld [vmem:[%s5 + $0x8] sm:$0xff]
  %v198 = vld [vmem:[%s5 + $0x10] sm:$0xff]
  %v199 = vld [vmem:[%s5 + $0x18] sm:$0xff]
  %v200 = vld [vmem:[%s5 + $0x20] sm:$0xff]
  %v201 = vld [vmem:[%s5 + $0x28] sm:$0xff]
  %v202 = vld [vmem:[%s5 + $0x30] sm:$0xff]
  %v203 = vld [vmem:[%s5 + $0x38] sm:$0xff]
  %v204 = vld [vmem:[%s5 + $0x40] sm:$0xff]
  %v205 = vld [vmem:[%s5 + $0x48] sm:$0xff]
  %v206 = vld [vmem:[%s5 + $0x50] sm:$0xff]
  %v207 = vld [vmem:[%s5 + $0x58] sm:$0xff]
  %v208 = vld [vmem:[%s5 + $0x60] sm:$0xff]
  %v209 = vld [vmem:[%s5 + $0x68] sm:$0xff]
  %v210 = vld [vmem:[%s5 + $0x70] sm:$0xff]
  %v211 = vld [vmem:[%s5 + $0x78] sm:$0xff]
  %v212 = vld [vmem:[%s6] sm:$0x1]
  %v214 = vlaneseq
  %v215 = vshrl.u32 %v214, 7
  %v216 = vsub.s32 0, %v215
  %v217 = vrot.slane %v212, %v216
  %219 = vmatprep.subr.mxu0 0.0
  %220 = vmatpush1.msra.mxu0 %v196
  %221 = vmatprep.subr.mxu0 0.0
  %222 = vmatpush1.msra.mxu0 %v197
  %223 = vmatprep.subr.mxu0 0.0
  %224 = vmatpush1.msra.mxu0 %v198
  %225 = vmatprep.subr.mxu0 0.0
  %226 = vmatpush1.msra.mxu0 %v199
  %227 = vmatprep.subr.mxu0 0.0
  %228 = vmatpush1.msra.mxu0 %v200
  %229 = vmatprep.subr.mxu0 0.0
  %230 = vmatpush1.msra.mxu0 %v201
  %231 = vmatprep.subr.mxu0 0.0
  %232 = vmatpush1.msra.mxu0 %v202
  %233 = vmatprep.subr.mxu0 0.0
  %234 = vmatpush1.msra.mxu0 %v203
  %235 = vmatprep.subr.mxu0 0.0
  %236 = vmatpush1.msra.mxu0 %v204
  %237 = vmatprep.subr.mxu0 0.0
  %238 = vmatpush1.msra.mxu0 %v205
  %239 = vmatprep.subr.mxu0 0.0
  %240 = vmatpush1.msra.mxu0 %v206
  %241 = vmatprep.subr.mxu0 0.0
  %242 = vmatpush1.msra.mxu0 %v207
  %243 = vmatprep.subr.mxu0 0.0
  %244 = vmatpush1.msra.mxu0 %v208
  %245 = vmatprep.subr.mxu0 0.0
  %246 = vmatpush1.msra.mxu0 %v209
  %247 = vmatprep.subr.mxu0 0.0
  %248 = vmatpush1.msra.mxu0 %v210
  %249 = vmatprep.subr.mxu0 0.0
  %250 = vmatpush1.msra.mxu0 %v211
  %251 = vmatprep.subr.mxu0 0.0
  %252 = vmatpush1.msra.mxu0 0.0
  %253 = vmatprep.subr.mxu0 0.0
  %254 = vmatpush1.msra.mxu0 0.0
  %255 = vmatprep.subr.mxu0 0.0
  %256 = vmatpush1.msra.mxu0 0.0
  %257 = vmatprep.subr.mxu0 0.0
  %258 = vmatpush1.msra.mxu0 0.0
  %259 = vmatprep.subr.mxu0 0.0
  %260 = vmatpush1.msra.mxu0 0.0
  %261 = vmatprep.subr.mxu0 0.0
  %262 = vmatpush1.msra.mxu0 0.0
  %263 = vmatprep.subr.mxu0 0.0
  %264 = vmatpush1.msra.mxu0 0.0
  %265 = vmatprep.subr.mxu0 0.0
  %266 = vmatpush1.msra.mxu0 0.0
  %267 = vmatprep.subr.mxu0 0.0
  %268 = vmatpush1.msra.mxu0 0.0
  %269 = vmatprep.subr.mxu0 0.0
  %270 = vmatpush1.msra.mxu0 0.0
  %271 = vmatprep.subr.mxu0 0.0
  %272 = vmatpush1.msra.mxu0 0.0
  %273 = vmatprep.subr.mxu0 0.0
  %274 = vmatpush1.msra.mxu0 0.0
  %275 = vmatprep.subr.mxu0 0.0
  %276 = vmatpush1.msra.mxu0 0.0
  %277 = vmatprep.subr.mxu0 0.0
  %278 = vmatpush1.msra.mxu0 0.0
  %279 = vmatprep.subr.mxu0 0.0
  %280 = vmatpush1.msra.mxu0 0.0
  %281 = vmatprep.subr.mxu0 0.0
  %282 = vmatpush1.msra.mxu0 0.0
  %283 = vmatprep.mubr.f32.mxu0 0.0
  %284 = vmatmul.mubr.f32.gmra.mrb[0].mxu0 %v195
  %v285 = vpop.f32.mrb[0].mxu0
  %v286 = vadd.f32 %v217, %v285
  %v287 = vpop.f32.mrb[0].mxu0
  %288 = vdwg.mxu0
  %vm289 = vcmp.gt.f32.partialorder %v286, 0.0
  %v290 = vmul.f32 %v286, 0.2
  %v291 = vsel %vm289, %v286, %v290
  %v292 = vld [vmem:[%s7] sm:$0xff]
  %v293 = vld [vmem:[%s7 + $0x8] sm:$0xff]
  %v294 = vld [vmem:[%s7 + $0x10] sm:$0xff]
  %v295 = vld [vmem:[%s7 + $0x18] sm:$0xff]
  %v296 = vld [vmem:[%s7 + $0x20] sm:$0xff]
  %v297 = vld [vmem:[%s7 + $0x28] sm:$0xff]
  %v298 = vld [vmem:[%s7 + $0x30] sm:$0xff]
  %v299 = vld [vmem:[%s7 + $0x38] sm:$0xff]
  %v300 = vld [vmem:[%s7 + $0x40] sm:$0xff]
  %v301 = vld [vmem:[%s7 + $0x48] sm:$0xff]
  %v302 = vld [vmem:[%s7 + $0x50] sm:$0xff]
  %v303 = vld [vmem:[%s7 + $0x58] sm:$0xff]
  %v304 = vld [vmem:[%s7 + $0x60] sm:$0xff]
  %v305 = vld [vmem:[%s7 + $0x68] sm:$0xff]
  %v306 = vld [vmem:[%s7 + $0x70] sm:$0xff]
  %v307 = vld [vmem:[%s7 + $0x78] sm:$0xff]
  %v308 = vld [vmem:[%s8] sm:$0x1]
  %v310 = vlaneseq
  %v311 = vshrl.u32 %v310, 7
  %v312 = vsub.s32 0, %v311
  %v313 = vrot.slane %v308, %v312
  %315 = vmatprep.subr.mxu0 0.0
  %316 = vmatpush1.msra.mxu0 %v292
  %317 = vmatprep.subr.mxu0 0.0
  %318 = vmatpush1.msra.mxu0 %v293
  %319 = vmatprep.subr.mxu0 0.0
  %320 = vmatpush1.msra.mxu0 %v294
  %321 = vmatprep.subr.mxu0 0.0
  %322 = vmatpush1.msra.mxu0 %v295
  %323 = vmatprep.subr.mxu0 0.0
  %324 = vmatpush1.msra.mxu0 %v296
  %325 = vmatprep.subr.mxu0 0.0
  %326 = vmatpush1.msra.mxu0 %v297
  %327 = vmatprep.subr.mxu0 0.0
  %328 = vmatpush1.msra.mxu0 %v298
  %329 = vmatprep.subr.mxu0 0.0
  %330 = vmatpush1.msra.mxu0 %v299
  %331 = vmatprep.subr.mxu0 0.0
  %332 = vmatpush1.msra.mxu0 %v300
  %333 = vmatprep.subr.mxu0 0.0
  %334 = vmatpush1.msra.mxu0 %v301
  %335 = vmatprep.subr.mxu0 0.0
  %336 = vmatpush1.msra.mxu0 %v302
  %337 = vmatprep.subr.mxu0 0.0
  %338 = vmatpush1.msra.mxu0 %v303
  %339 = vmatprep.subr.mxu0 0.0
  %340 = vmatpush1.msra.mxu0 %v304
  %341 = vmatprep.subr.mxu0 0.0
  %342 = vmatpush1.msra.mxu0 %v305
  %343 = vmatprep.subr.mxu0 0.0
  %344 = vmatpush1.msra.mxu0 %v306
  %345 = vmatprep.subr.mxu0 0.0
  %346 = vmatpush1.msra.mxu0 %v307
  %347 = vmatprep.subr.mxu0 0.0
  %348 = vmatpush1.msra.mxu0 0.0
  %349 = vmatprep.subr.mxu0 0.0
  %350 = vmatpush1.msra.mxu0 0.0
  %351 = vmatprep.subr.mxu0 0.0
  %352 = vmatpush1.msra.mxu0 0.0
  %353 = vmatprep.subr.mxu0 0.0
  %354 = vmatpush1.msra.mxu0 0.0
  %355 = vmatprep.subr.mxu0 0.0
  %356 = vmatpush1.msra.mxu0 0.0
  %357 = vmatprep.subr.mxu0 0.0
  %358 = vmatpush1.msra.mxu0 0.0
  %359 = vmatprep.subr.mxu0 0.0
  %360 = vmatpush1.msra.mxu0 0.0
  %361 = vmatprep.subr.mxu0 0.0
  %362 = vmatpush1.msra.mxu0 0.0
  %363 = vmatprep.subr.mxu0 0.0
  %364 = vmatpush1.msra.mxu0 0.0
  %365 = vmatprep.subr.mxu0 0.0
  %366 = vmatpush1.msra.mxu0 0.0
  %367 = vmatprep.subr.mxu0 0.0
  %368 = vmatpush1.msra.mxu0 0.0
  %369 = vmatprep.subr.mxu0 0.0
  %370 = vmatpush1.msra.mxu0 0.0
  %371 = vmatprep.subr.mxu0 0.0
  %372 = vmatpush1.msra.mxu0 0.0
  %373 = vmatprep.subr.mxu0 0.0
  %374 = vmatpush1.msra.mxu0 0.0
  %375 = vmatprep.subr.mxu0 0.0
  %376 = vmatpush1.msra.mxu0 0.0
  %377 = vmatprep.subr.mxu0 0.0
  %378 = vmatpush1.msra.mxu0 0.0
  %379 = vmatprep.mubr.f32.mxu0 0.0
  %380 = vmatmul.mubr.f32.gmra.mrb[0].mxu0 %v291
  %v381 = vpop.f32.mrb[0].mxu0
  %v382 = vadd.f32 %v313, %v381
  %v383 = vpop.f32.mrb[0].mxu0
  %384 = vdwg.mxu0
  %vm385 = vcmask 7168
  %386 = vst.msk [vmem:[%s9] sm:$0xff] %vm385, %v382
  // Predicated region
  $region38: #{discriminator_forward.1} parent=0 // pred_check
    _
  $region39: #{discriminator_forward.1} parent=0 // pred_check_branch
    %388 = sbr.rel (0) target = $region41
  $region40: #{discriminator_forward.1} parent=0 // pred_region
    _
  $region41: #{discriminator_forward.1} parent=0 // pred_fallthru
    _
  // Predicated region
  $region42: #{discriminator_forward.1} parent=0 // pred_check
    _
  $region43: #{discriminator_forward.1} parent=0 // pred_check_branch
    %390 = sbr.rel (0) target = $region45
  $region44: #{discriminator_forward.1} parent=0 // pred_region
    _
  $region45: #{discriminator_forward.1} parent=0 // pred_fallthru
    _

</llo_original>
